<compile_context>
chip_gen: v6e
topology: v6e:2x2x1
jax: 0.10.0
libtpu: 0.0.40
codegen_flags: <defaults>
</compile_context>

<pallas_src>
import functools

import jax
import jax.numpy as jnp
from jax.experimental import pallas as pl
from jax.experimental.pallas import tpu as pltpu


def _round_up(x, m):
    return (x + m - 1) // m * m


# --------------------------------------------------------------------------
# Kernel
# --------------------------------------------------------------------------
def _transition_kernel(x_ref, g_ref, b_ref, w12_ref, wo_ref, o_ref,
                       xn_ref, acc_ref):
    # Grid: (row_tiles [parallel], hidden_tiles [arbitrary]).
    # x_ref:   (tm, dim)          token tile (fetched once per row tile)
    # w12_ref: (1, dim, 2*th)     [W1_tile | W2_tile], bf16
    # wo_ref:  (1, th, dim)       Wo hidden-tile, bf16
    # xn_ref:  (tm, dim) bf16     cached LayerNorm output
    # acc_ref: (tm, dim) fp32     output accumulator over hidden tiles
    t = pl.program_id(1)
    nt = pl.num_programs(1)
    th = wo_ref.shape[1]

    @pl.when(t == 0)
    def _():
        # LayerNorm in fp32, biased variance via E[x^2] - mean^2, eps=1e-5.
        x = x_ref[...].astype(jnp.float32)
        mean = jnp.mean(x, axis=-1, keepdims=True)
        var = jnp.mean(x * x, axis=-1, keepdims=True) - mean * mean
        xn = (x - mean) * jax.lax.rsqrt(var + 1e-5)
        xn = xn * g_ref[...] + b_ref[...]
        xn_ref[...] = xn.astype(xn_ref.dtype)
        acc_ref[...] = jnp.zeros_like(acc_ref)

    xn = xn_ref[...]                                  # bf16 (tm, dim)
    # Fused gate/up projection for this hidden tile (bf16 MXU, fp32 accum).
    ab = jnp.dot(xn, w12_ref[0], preferred_element_type=jnp.float32)
    a = ab[:, :th]                                    # 128-lane aligned split
    b = ab[:, th:]
    h = (a * jax.nn.sigmoid(a)) * b                   # silu(a) * b, fp32

    acc_ref[...] += jnp.dot(h.astype(wo_ref.dtype), wo_ref[0],
                            preferred_element_type=jnp.float32)

    @pl.when(t == nt - 1)
    def _():
        o_ref[...] = acc_ref[...].astype(o_ref.dtype)


# --------------------------------------------------------------------------
# One-time weight preparation (hoisted out of the per-call forward)
# --------------------------------------------------------------------------
def prepare_transition_weights(w1, w2, wo, *, hidden_tile=None):
    """Fuse/cast weights once.

    w1, w2: (dim, hidden); wo: (hidden, dim)  -- i.e. PyTorch weight.T.
    Returns:
      w12_tiled: (nt, dim, 2*th) bf16  (first th cols = W1 tile, next th = W2)
      wo_tiled:  (nt, th, dim)   bf16
    `hidden` is zero-padded to nt*th (th a multiple of 128); the zero
    columns/rows contribute exactly zero to the output, so this is exact.
    """
    dim, hidden = w1.shape
    if hidden_tile is None:
        # Keep per-tile bf16 weight bytes (~6*dim*th) under ~16 MiB so a tile
        # always fits comfortably, even on v7x's 64 MiB VMEM.
        max_th = max(128, ((16 << 20) // (6 * dim)) // 128 * 128)
        hidden_tile = min(_round_up(hidden, 128), max_th)
    th = hidden_tile
    hp = _round_up(hidden, th)
    nt = hp // th
    pad = hp - hidden

    w1p = jnp.pad(w1, ((0, 0), (0, pad)))
    w2p = jnp.pad(w2, ((0, 0), (0, pad)))
    wop = jnp.pad(wo, ((0, pad), (0, 0)))

    w1t = w1p.reshape(dim, nt, th).transpose(1, 0, 2)     # (nt, dim, th)
    w2t = w2p.reshape(dim, nt, th).transpose(1, 0, 2)
    w12 = jnp.concatenate([w1t, w2t], axis=-1).astype(jnp.bfloat16)
    wot = wop.reshape(nt, th, dim).astype(jnp.bfloat16)
    return w12, wot


# --------------------------------------------------------------------------
# Forward
# --------------------------------------------------------------------------
@functools.partial(jax.jit, static_argnames=("tm",))
def transition_forward(x, gamma, beta, w12, wot, *, tm=None):
    """x: (..., dim). w12/wot from prepare_transition_weights."""
    nt, dim, two_th = w12.shape
    th = two_th // 2
    hidden_pad = nt * th
    lead = x.shape[:-1]
    xf = x.reshape(-1, dim)
    tokens = xf.shape[0]
    itemsize = jnp.dtype(x.dtype).itemsize

    # Device VMEM capacity (trace-time query; conservative fallback).
    try:
        vmem_cap = int(pltpu.get_tpu_info().vmem_capacity_bytes)
    except Exception:
        vmem_cap = 64 << 20

    if tm is None:
        tm = 256 if vmem_cap <= (64 << 20) else 512   # v7x: 256, v5e/v6e: 512

    # Row tile: multiple of 8, no wrapper-side padding (partial last block is
    # masked by Pallas). Guarantee >= 2 row tiles so both v7x cores get work.
    tm_eff = min(tm, _round_up(max(tokens, 8), 8))
    if tokens > 8 and pl.cdiv(tokens, tm_eff) < 2:
        tm_eff = max(8, _round_up(pl.cdiv(tokens, 2), 8))
    row_tiles = pl.cdiv(tokens, tm_eff)
    grid = (row_tiles, nt)

    gamma2 = gamma.reshape(1, dim).astype(jnp.float32)
    beta2 = beta.reshape(1, dim).astype(jnp.float32)

    # Weights are grid-invariant only when nt == 1 -> single-buffer them then;
    # otherwise keep default double-buffering so the hidden-tile DMA overlaps.
    w_bufs = 1 if nt == 1 else 2

    # VMEM budget: x/out double-buffered tiles, single-buffered gamma/beta,
    # weight tile buffers, scratches (xn bf16 + acc fp32), fp32 temporaries.
    x_bytes = 2 * tm_eff * dim * itemsize
    o_bytes = 2 * tm_eff * dim * itemsize
    gb_bytes = 2 * dim * 4
    w_bytes = w_bufs * (dim * 2 * th + th * dim) * 2          # bf16
    scratch_bytes = tm_eff * dim * (4 + 2)
    temp_bytes = tm_eff * (2 * th) * 4 * 3
    vmem_limit = int(1.5 * (x_bytes + o_bytes + gb_bytes + w_bytes
                            + scratch_bytes + temp_bytes)) + (4 << 20)
    vmem_limit = min(max(vmem_limit, 32 << 20), int(0.8 * vmem_cap))

    weight_hbm = (dim * 2 * hidden_pad + hidden_pad * dim) * 2
    cost = pl.CostEstimate(
        flops=6 * tokens * dim * hidden_pad,
        transcendentals=tokens * hidden_pad,
        bytes_accessed=2 * tokens * dim * itemsize
        + (weight_hbm if nt == 1 else row_tiles * weight_hbm),
    )

    out = pl.pallas_call(
        _transition_kernel,
        out_shape=jax.ShapeDtypeStruct((tokens, dim), x.dtype),
        grid_spec=pltpu.PrefetchScalarGridSpec(
            num_scalar_prefetch=0,
            grid=grid,
            in_specs=[
                pl.BlockSpec((tm_eff, dim), lambda i, t: (i, 0)),      # x tile
                pl.BlockSpec((1, dim), lambda i, t: (0, 0),
                             pipeline_mode=pl.Buffered(1)),            # gamma
                pl.BlockSpec((1, dim), lambda i, t: (0, 0),
                             pipeline_mode=pl.Buffered(1)),            # beta
                pl.BlockSpec((1, dim, 2 * th), lambda i, t: (t, 0, 0),
                             pipeline_mode=pl.Buffered(w_bufs)),       # W1|W2
                pl.BlockSpec((1, th, dim), lambda i, t: (t, 0, 0),
                             pipeline_mode=pl.Buffered(w_bufs)),       # Wo
            ],
            out_specs=pl.BlockSpec((tm_eff, dim), lambda i, t: (i, 0)),
            scratch_shapes=[
                pltpu.VMEM((tm_eff, dim), jnp.bfloat16),   # cached LN(x)
                pltpu.VMEM((tm_eff, dim), jnp.float32),    # output accumulator
            ],
        ),
        compiler_params=pltpu.CompilerParams(
            dimension_semantics=("parallel", "arbitrary"),
            vmem_limit_bytes=vmem_limit,
        ),
        cost_estimate=cost,
    )(xf, gamma2, beta2, w12, wot)

    return out.reshape(*lead, dim)


# --------------------------------------------------------------------------
# Reference & test
# --------------------------------------------------------------------------
def _reference(x, gamma, beta, w1, w2, wo):
    mean = jnp.mean(x, axis=-1, keepdims=True)
    var = jnp.mean((x - mean) ** 2, axis=-1, keepdims=True)
    xn = (x - mean) * jax.lax.rsqrt(var + 1e-5) * gamma + beta
    a = xn @ w1
    b = xn @ w2
    return (jax.nn.silu(a) * b) @ wo


if __name__ == "__main__":
    # Small shapes consistent with the module: batch=2, seq=8, dim=32, n=4.
    B, S, DIM, N = 2, 8, 32, 4
    HID = N * DIM

    key = jax.random.PRNGKey(0)
    kx, k1, k2, k3 = jax.random.split(key, 4)

    x = jax.random.normal(kx, (B, S, DIM), dtype=jnp.float32)

    # Module shapes: LayerNorm(dim), Linear(dim, n*dim) x2, Linear(n*dim, dim);
    # all linears bias-free. Weights stored as (in, out) = PyTorch weight.T.
    gamma = jnp.ones((DIM,), dtype=jnp.float32)
    beta = jnp.zeros((DIM,), dtype=jnp.float32)
    w1 = jax.random.normal(k1, (DIM, HID), dtype=jnp.float32) / jnp.sqrt(DIM)
    w2 = jax.random.normal(k2, (DIM, HID), dtype=jnp.float32) / jnp.sqrt(DIM)
    wo = jax.random.normal(k3, (HID, DIM), dtype=jnp.float32) / jnp.sqrt(HID)

    # One-time weight fusion / bf16 cast (hoisted out of the forward).
    w12, wot = prepare_transition_weights(w1, w2, wo)

    out = transition_forward(x, gamma, beta, w12, wot)
    out = jax.block_until_ready(out)

    ref = _reference(x, gamma, beta, w1, w2, wo)
    assert out.shape == (B, S, DIM)
    # bf16 matmul operands (fp32 accumulation) -> relaxed tolerance.
    assert jnp.allclose(out, ref, atol=5e-2, rtol=5e-2), "mismatch vs reference"

    print("KERNEL_OK")
</pallas_src>

<mosaic_0001>
module attributes {stable_mosaic.version = 11 : i64} {
  func.func @_transition_kernel(%arg0: i32, %arg1: i32, %arg2: memref<8x32xf32, #tpu.memory_space<vmem>>, %arg3: memref<1x32xf32, #tpu.memory_space<vmem>>, %arg4: memref<1x32xf32, #tpu.memory_space<vmem>>, %arg5: memref<1x32x256xbf16, #tpu.memory_space<vmem>>, %arg6: memref<1x128x32xbf16, #tpu.memory_space<vmem>>, %arg7: memref<8x32xf32, #tpu.memory_space<vmem>>, %arg8: memref<8x32xbf16, #tpu.memory_space<vmem>>, %arg9: memref<8x32xf32, #tpu.memory_space<vmem>>) attributes {dimension_semantics = [#tpu.dimension_semantics<parallel>, #tpu.dimension_semantics<arbitrary>], iteration_bounds = array<i64: 2, 1>, scalar_prefetch = 0 : i64, scratch_operands = 2 : i64, tpu.core_type = #tpu.core_type<tc>, window_params = [{transform_indices = @transform_0, window_bounds = array<i64: 8, 32>}, {pipeline_mode = #tpu.pipeline_mode<synchronous>, transform_indices = @transform_1, window_bounds = array<i64: 1, 32>}, {pipeline_mode = #tpu.pipeline_mode<synchronous>, transform_indices = @transform_2, window_bounds = array<i64: 1, 32>}, {pipeline_mode = #tpu.pipeline_mode<synchronous>, transform_indices = @transform_3, window_bounds = array<i64: 1, 32, 256>}, {pipeline_mode = #tpu.pipeline_mode<synchronous>, transform_indices = @transform_4, window_bounds = array<i64: 1, 128, 32>}, {transform_indices = @transform_5, window_bounds = array<i64: 8, 32>}]} {
    %c0_i32 = arith.constant 0 : i32
    %0 = arith.cmpi eq, %arg1, %c0_i32 : i32
    %1 = arith.extui %0 : i1 to i32
    %c0_i32_0 = arith.constant 0 : i32
    %2 = arith.cmpi ne, %1, %c0_i32_0 : i32
    scf.if %2 {
      %c0_16 = arith.constant 0 : index
      %c0_17 = arith.constant 0 : index
      %26 = vector.load %arg2[%c0_16, %c0_17] : memref<8x32xf32, #tpu.memory_space<vmem>>, vector<8x32xf32>
      %cst_18 = arith.constant dense<0.000000e+00> : vector<8xf32>
      %27 = vector.multi_reduction <add>, %26, %cst_18 [1] : vector<8x32xf32> to vector<8xf32>
      %28 = vector.shape_cast %27 : vector<8xf32> to vector<8x1xf32>
      %cst_19 = arith.constant 3.200000e+01 : f32
      %29 = vector.broadcast %cst_19 : f32 to vector<8x1xf32>
      %30 = arith.divf %28, %29 : vector<8x1xf32>
      %31 = arith.mulf %26, %26 : vector<8x32xf32>
      %cst_20 = arith.constant dense<0.000000e+00> : vector<8xf32>
      %32 = vector.multi_reduction <add>, %31, %cst_20 [1] : vector<8x32xf32> to vector<8xf32>
      %33 = vector.shape_cast %32 : vector<8xf32> to vector<8x1xf32>
      %cst_21 = arith.constant 3.200000e+01 : f32
      %34 = vector.broadcast %cst_21 : f32 to vector<8x1xf32>
      %35 = arith.divf %33, %34 : vector<8x1xf32>
      %36 = arith.mulf %30, %30 : vector<8x1xf32>
      %37 = arith.subf %35, %36 : vector<8x1xf32>
      %38 = vector.broadcast %30 : vector<8x1xf32> to vector<8x32xf32>
      %39 = arith.subf %26, %38 : vector<8x32xf32>
      %cst_22 = arith.constant 9.99999974E-6 : f32
      %40 = vector.broadcast %cst_22 : f32 to vector<8x1xf32>
      %41 = arith.addf %37, %40 : vector<8x1xf32>
      %42 = math.rsqrt %41 : vector<8x1xf32>
      %43 = vector.broadcast %42 : vector<8x1xf32> to vector<8x32xf32>
      %44 = arith.mulf %39, %43 : vector<8x32xf32>
      %c0_23 = arith.constant 0 : index
      %c0_24 = arith.constant 0 : index
      %45 = vector.load %arg3[%c0_23, %c0_24] : memref<1x32xf32, #tpu.memory_space<vmem>>, vector<1x32xf32>
      %46 = vector.broadcast %45 : vector<1x32xf32> to vector<8x32xf32>
      %47 = arith.mulf %44, %46 : vector<8x32xf32>
      %c0_25 = arith.constant 0 : index
      %c0_26 = arith.constant 0 : index
      %48 = vector.load %arg4[%c0_25, %c0_26] : memref<1x32xf32, #tpu.memory_space<vmem>>, vector<1x32xf32>
      %49 = vector.broadcast %48 : vector<1x32xf32> to vector<8x32xf32>
      %50 = arith.addf %47, %49 : vector<8x32xf32>
      %51 = arith.truncf %50 : vector<8x32xf32> to vector<8x32xbf16>
      %c0_27 = arith.constant 0 : index
      %c0_28 = arith.constant 0 : index
      %52 = vector.load %arg8[%c0_27, %c0_28] : memref<8x32xbf16, #tpu.memory_space<vmem>>, vector<8x32xbf16>
      tpu.vector_store %arg8[%c0_27, %c0_28], %51 {strides = array<i32>} : memref<8x32xbf16, #tpu.memory_space<vmem>>, vector<8x32xbf16>,
      %cst_29 = arith.constant 0.000000e+00 : f32
      %53 = vector.broadcast %cst_29 : f32 to vector<8x32xf32>
      %c0_30 = arith.constant 0 : index
      %c0_31 = arith.constant 0 : index
      %54 = vector.load %arg9[%c0_30, %c0_31] : memref<8x32xf32, #tpu.memory_space<vmem>>, vector<8x32xf32>
      tpu.vector_store %arg9[%c0_30, %c0_31], %53 {strides = array<i32>} : memref<8x32xf32, #tpu.memory_space<vmem>>, vector<8x32xf32>,
    } else {
    }
    %c0 = arith.constant 0 : index
    %c0_1 = arith.constant 0 : index
    %3 = vector.load %arg8[%c0, %c0_1] : memref<8x32xbf16, #tpu.memory_space<vmem>>, vector<8x32xbf16>
    %c0_2 = arith.constant 0 : index
    %c0_3 = arith.constant 0 : index
    %c0_4 = arith.constant 0 : index
    %4 = vector.load %arg5[%c0_2, %c0_3, %c0_4] : memref<1x32x256xbf16, #tpu.memory_space<vmem>>, vector<1x32x256xbf16>
    %5 = vector.shape_cast %4 : vector<1x32x256xbf16> to vector<32x256xbf16>
    %cst = arith.constant dense<0.000000e+00> : vector<8x256xf32>
    %6 = tpu.matmul %3, %5, %cst {dimension_numbers = #tpu.dot_dimension_numbers<[1], [0], [0], [1], [0, 0, 1, 1], [], []>} : vector<8x32xbf16>, vector<32x256xbf16>, vector<8x256xf32> -> vector<8x256xf32>
    %7 = vector.extract_strided_slice %6 {offsets = [0, 0], sizes = [8, 128], strides = [1, 1]} : vector<8x256xf32> to vector<8x128xf32>
    %8 = vector.extract_strided_slice %6 {offsets = [0, 128], sizes = [8, 128], strides = [1, 1]} : vector<8x256xf32> to vector<8x128xf32>
    %9 = arith.negf %7 : vector<8x128xf32>
    %10 = math.exp %9 : vector<8x128xf32>
    %cst_5 = arith.constant 1.000000e+00 : f32
    %11 = vector.broadcast %cst_5 : f32 to vector<8x128xf32>
    %12 = arith.addf %11, %10 : vector<8x128xf32>
    %13 = arith.divf %11, %12 : vector<8x128xf32>
    %14 = arith.mulf %7, %13 : vector<8x128xf32>
    %15 = arith.mulf %14, %8 : vector<8x128xf32>
    %c0_6 = arith.constant 0 : index
    %c0_7 = arith.constant 0 : index
    %16 = vector.load %arg9[%c0_6, %c0_7] : memref<8x32xf32, #tpu.memory_space<vmem>>, vector<8x32xf32>
    %17 = arith.truncf %15 : vector<8x128xf32> to vector<8x128xbf16>
    %c0_8 = arith.constant 0 : index
    %c0_9 = arith.constant 0 : index
    %c0_10 = arith.constant 0 : index
    %18 = vector.load %arg6[%c0_8, %c0_9, %c0_10] : memref<1x128x32xbf16, #tpu.memory_space<vmem>>, vector<1x128x32xbf16>
    %19 = vector.shape_cast %18 : vector<1x128x32xbf16> to vector<128x32xbf16>
    %cst_11 = arith.constant dense<0.000000e+00> : vector<8x32xf32>
    %20 = tpu.matmul %17, %19, %cst_11 {dimension_numbers = #tpu.dot_dimension_numbers<[1], [0], [0], [1], [0, 0, 1, 1], [], []>} : vector<8x128xbf16>, vector<128x32xbf16>, vector<8x32xf32> -> vector<8x32xf32>
    %21 = arith.addf %16, %20 : vector<8x32xf32>
    %c0_12 = arith.constant 0 : index
    %c0_13 = arith.constant 0 : index
    %22 = vector.load %arg9[%c0_12, %c0_13] : memref<8x32xf32, #tpu.memory_space<vmem>>, vector<8x32xf32>
    tpu.vector_store %arg9[%c0_12, %c0_13], %21 {strides = array<i32>} : memref<8x32xf32, #tpu.memory_space<vmem>>, vector<8x32xf32>,
    %c0_i32_14 = arith.constant 0 : i32
    %23 = arith.cmpi eq, %arg1, %c0_i32_14 : i32
    %24 = arith.extui %23 : i1 to i32
    %c0_i32_15 = arith.constant 0 : i32
    %25 = arith.cmpi ne, %24, %c0_i32_15 : i32
    scf.if %25 {
      %c0_16 = arith.constant 0 : index
      %c0_17 = arith.constant 0 : index
      %26 = vector.load %arg9[%c0_16, %c0_17] : memref<8x32xf32, #tpu.memory_space<vmem>>, vector<8x32xf32>
      %c0_18 = arith.constant 0 : index
      %c0_19 = arith.constant 0 : index
      %27 = vector.load %arg7[%c0_18, %c0_19] : memref<8x32xf32, #tpu.memory_space<vmem>>, vector<8x32xf32>
      tpu.vector_store %arg7[%c0_18, %c0_19], %26 {strides = array<i32>} : memref<8x32xf32, #tpu.memory_space<vmem>>, vector<8x32xf32>,
    } else {
    }
    return
  }
  func.func @transform_0(%arg0: i32, %arg1: i32) -> (i32, i32) {
    %c0_i32 = arith.constant 0 : i32
    %c0_i32_0 = arith.constant 0 : i32
    return %arg0, %c0_i32 : i32, i32
  }
  func.func @transform_1(%arg0: i32, %arg1: i32) -> (i32, i32) {
    %c0_i32 = arith.constant 0 : i32
    %c0_i32_0 = arith.constant 0 : i32
    %c0_i32_1 = arith.constant 0 : i32
    return %c0_i32, %c0_i32_0 : i32, i32
  }
  func.func @transform_2(%arg0: i32, %arg1: i32) -> (i32, i32) {
    %c0_i32 = arith.constant 0 : i32
    %c0_i32_0 = arith.constant 0 : i32
    %c0_i32_1 = arith.constant 0 : i32
    return %c0_i32, %c0_i32_0 : i32, i32
  }
  func.func @transform_3(%arg0: i32, %arg1: i32) -> (i32, i32, i32) {
    %c0_i32 = arith.constant 0 : i32
    %c0_i32_0 = arith.constant 0 : i32
    %c0_i32_1 = arith.constant 0 : i32
    return %arg1, %c0_i32, %c0_i32_0 : i32, i32, i32
  }
  func.func @transform_4(%arg0: i32, %arg1: i32) -> (i32, i32, i32) {
    %c0_i32 = arith.constant 0 : i32
    %c0_i32_0 = arith.constant 0 : i32
    %c0_i32_1 = arith.constant 0 : i32
    return %arg1, %c0_i32, %c0_i32_0 : i32, i32, i32
  }
  func.func @transform_5(%arg0: i32, %arg1: i32) -> (i32, i32) {
    %c0_i32 = arith.constant 0 : i32
    %c0_i32_0 = arith.constant 0 : i32
    return %arg0, %c0_i32 : i32, i32
  }
}

</mosaic_0001>

<llo_original>
// kernel: transition_forward.1
$region0: #{transition_forward.1}
  #allocation0 [shape = 'u32[]', space=smem, size = 0x4, offset = 0x4, fixed_abs, tag = 'smem constant byte address 0x4 - core index']
  #allocation1 [shape = 'u32[144,128]{1,0:T(1,128)}', space=vmem, size = 0x12000, scoped, tag = 'internal scratch']
  #allocation2 [shape = 'bf16[8,32]{1,0:T(8,128)(2,1)}', space=vmem, size = 0x800, scoped, tag = 'scratch operand']
  #allocation3 [shape = 'f32[8,32]{1,0:T(8,128)}', space=vmem, size = 0x1000, scoped, tag = 'scratch operand']
  %s0 = inlined_call_operand.vmem [shape: f32[16,32], index: 0, kind: input, shape index: {}]
  %s1 = inlined_call_operand.vmem [shape: f32[1,32], index: 1, kind: input, shape index: {}]
  %s2 = inlined_call_operand.vmem [shape: f32[1,32], index: 2, kind: input, shape index: {}]
  %s3 = inlined_call_operand.vmem [shape: bf16[1,32,256], index: 3, kind: input, shape index: {}]
  %s4 = inlined_call_operand.vmem [shape: bf16[1,128,32], index: 4, kind: input, shape index: {}]
  %s5 = inlined_call_operand.hbm [shape: f32[16,32], index: 5, kind: output, shape index: {}]
  %s6 = sld [smem:[#allocation0]]
  $region61: #{transition_forward.1} parent=0
    _
  %s8 = ssub.s32 1, %s6
  %s9 = scalar_select 0, %s8, %s6
  $region1: #{transition_forward.1} parent=0
    #allocation4 [shape = 'u8[8192]{0}', space=vmem, size = 0x2000, scoped, tag = 'output window, operand 0']
    #allocation5 [shape = 's32[2]{0}', space=sflag, size = 0x8, scoped, tag = 'scoped memory for transition_forward.1']
    %10 = vsyncpa [#allocation5], 0
    %s11 = scalar_lea.sflag [#allocation5], 1
    %12 = vsyncpa %s11, 0
    loop: start=0, step=1, limit=4
    $region2: #{transition_forward.1} parent=1 // loop_pre_header
      _
    $region3: #{transition_forward.1} parent=1 // loop_header
      %s14 = sphi 0, %s18
      %p15 = scmp.ge.s32.totalorder %s14, 4
      %s21 = sphi 0, %s33
      %s22 = sphi 0, %s29
      %s23 = sphi 0, %s21
      %s24 = sphi 0, %s22
      %s25 = sphi 0, %s23
      %s26 = sphi 0, %s24
      %s36 = sphi 0, %s38
      %s39 = sphi 0, %s36
      %s40 = sphi 0, %s39
      %s56 = sphi 0, %s40
      %s60 = sphi 0, %s60
      %s62 = sphi 0, %s60
      %s63 = sphi 0, %s62
      %s77 = sphi 0, %s63
      %s81 = sphi 0, %s81
      %s83 = sphi 0, %s81
      %s84 = sphi 0, %s83
      %s98 = sphi 0, %s84
      %s104 = sphi 0, %s106
      %s107 = sphi 0, %s104
      %s108 = sphi 0, %s107
      %s124 = sphi 0, %s108
      %s130 = sphi 0, %s132
      %s133 = sphi 0, %s130
      %s134 = sphi 0, %s133
      %s150 = sphi 0, %s134
      %s156 = sphi 0, %s158
      %s159 = sphi 0, %s156
      %s160 = sphi 0, %s159
      %s176 = sphi 0, %s160
    $region4: #{transition_forward.1} parent=1 // loop_header_branch
      %17 = sbr.rel (%p15) target = $region8
    $region5: #{transition_forward.1} parent=1 // loop_body
      %s19 = ssub.s32 %s14, 1
      %s20 = ssub.s32 %s14, 2
      %s27 = sadd.s32 1, %s22
      %p28 = scmp.ge.s32.totalorder %s27, 1
      %s29 = scalar_select %p28, 0, %s27
      %s30 = sadd.s32 1, %s21
      %s31 = scalar_select %p28, %s30, %s21
      %p32 = scmp.ge.s32.totalorder %s31, 2
      %s33 = scalar_select %p32, 0, %s31
      %s34 = ssub.s32 %s21, %s33
      %p35 = scmp.eq.s32.totalorder %s34, 0
      %s37 = sadd.s32 %s36, 1
      %s38 = scalar_select %p35, %s36, %s37
      %p41 = pneg %p35
      %p42 = scmp.eq.s32.totalorder %s14, 1
      %p43 = por %p41, %p42
      %p44 = scmp.ne.s32.totalorder %s36, %s39
      %p45 = scmp.eq.s32.totalorder %s14, 0
      %p46 = por %p44, %p45
      %p47 = scmp.ne.s32.totalorder %s36, %s39
      %p48 = scmp.eq.s32.totalorder %s19, 1
      %p49 = por %p47, %p48
      %p50 = scmp.ne.s32.totalorder %s39, %s40
      %p51 = scmp.eq.s32.totalorder %s19, 0
      %p52 = por %p50, %p51
      %p53 = scmp.ne.s32.totalorder %s39, %s40
      %p54 = scmp.eq.s32.totalorder %s20, 1
      %p55 = por %p53, %p54
      %p57 = scmp.ne.s32.totalorder %s40, %s56
      %p58 = scmp.eq.s32.totalorder %s20, 0
      %p59 = por %p57, %p58
      %s61 = sadd.s32 %s60, 1
      %p64 = scmp.eq.s32.totalorder %s14, 1
      %p65 = scmp.ne.s32.totalorder %s60, %s62
      %p66 = scmp.eq.s32.totalorder %s14, 0
      %p67 = por %p65, %p66
      %p68 = scmp.ne.s32.totalorder %s60, %s62
      %p69 = scmp.eq.s32.totalorder %s19, 1
      %p70 = por %p68, %p69
      %p71 = scmp.ne.s32.totalorder %s62, %s63
      %p72 = scmp.eq.s32.totalorder %s19, 0
      %p73 = por %p71, %p72
      %p74 = scmp.ne.s32.totalorder %s62, %s63
      %p75 = scmp.eq.s32.totalorder %s20, 1
      %p76 = por %p74, %p75
      %p78 = scmp.ne.s32.totalorder %s63, %s77
      %p79 = scmp.eq.s32.totalorder %s20, 0
      %p80 = por %p78, %p79
      %s82 = sadd.s32 %s81, 1
      %p85 = scmp.eq.s32.totalorder %s14, 1
      %p86 = scmp.ne.s32.totalorder %s81, %s83
      %p87 = scmp.eq.s32.totalorder %s14, 0
      %p88 = por %p86, %p87
      %p89 = scmp.ne.s32.totalorder %s81, %s83
      %p90 = scmp.eq.s32.totalorder %s19, 1
      %p91 = por %p89, %p90
      %p92 = scmp.ne.s32.totalorder %s83, %s84
      %p93 = scmp.eq.s32.totalorder %s19, 0
      %p94 = por %p92, %p93
      %p95 = scmp.ne.s32.totalorder %s83, %s84
      %p96 = scmp.eq.s32.totalorder %s20, 1
      %p97 = por %p95, %p96
      %p99 = scmp.ne.s32.totalorder %s84, %s98
      %p100 = scmp.eq.s32.totalorder %s20, 0
      %p101 = por %p99, %p100
      %s102 = ssub.s32 %s22, %s29
      %p103 = scmp.eq.s32.totalorder %s102, 0
      %s105 = sadd.s32 %s104, 1
      %s106 = scalar_select %p103, %s104, %s105
      %p109 = pneg %p103
      %p110 = scmp.eq.s32.totalorder %s14, 1
      %p111 = por %p109, %p110
      %p112 = scmp.ne.s32.totalorder %s104, %s107
      %p113 = scmp.eq.s32.totalorder %s14, 0
      %p114 = por %p112, %p113
      %p115 = scmp.ne.s32.totalorder %s104, %s107
      %p116 = scmp.eq.s32.totalorder %s19, 1
      %p117 = por %p115, %p116
      %p118 = scmp.ne.s32.totalorder %s107, %s108
      %p119 = scmp.eq.s32.totalorder %s19, 0
      %p120 = por %p118, %p119
      %p121 = scmp.ne.s32.totalorder %s107, %s108
      %p122 = scmp.eq.s32.totalorder %s20, 1
      %p123 = por %p121, %p122
      %p125 = scmp.ne.s32.totalorder %s108, %s124
      %p126 = scmp.eq.s32.totalorder %s20, 0
      %p127 = por %p125, %p126
      %s128 = ssub.s32 %s22, %s29
      %p129 = scmp.eq.s32.totalorder %s128, 0
      %s131 = sadd.s32 %s130, 1
      %s132 = scalar_select %p129, %s130, %s131
      %p135 = pneg %p129
      %p136 = scmp.eq.s32.totalorder %s14, 1
      %p137 = por %p135, %p136
      %p138 = scmp.ne.s32.totalorder %s130, %s133
      %p139 = scmp.eq.s32.totalorder %s14, 0
      %p140 = por %p138, %p139
      %p141 = scmp.ne.s32.totalorder %s130, %s133
      %p142 = scmp.eq.s32.totalorder %s19, 1
      %p143 = por %p141, %p142
      %p144 = scmp.ne.s32.totalorder %s133, %s134
      %p145 = scmp.eq.s32.totalorder %s19, 0
      %p146 = por %p144, %p145
      %p147 = scmp.ne.s32.totalorder %s133, %s134
      %p148 = scmp.eq.s32.totalorder %s20, 1
      %p149 = por %p147, %p148
      %p151 = scmp.ne.s32.totalorder %s134, %s150
      %p152 = scmp.eq.s32.totalorder %s20, 0
      %p153 = por %p151, %p152
      %s154 = ssub.s32 %s21, %s33
      %p155 = scmp.eq.s32.totalorder %s154, 0
      %s157 = sadd.s32 %s156, 1
      %s158 = scalar_select %p155, %s156, %s157
      %p161 = pneg %p155
      %p162 = scmp.eq.s32.totalorder %s14, 1
      %p163 = por %p161, %p162
      %p164 = scmp.ne.s32.totalorder %s156, %s159
      %p165 = scmp.eq.s32.totalorder %s14, 0
      %p166 = por %p164, %p165
      %p167 = scmp.ne.s32.totalorder %s156, %s159
      %p168 = scmp.eq.s32.totalorder %s19, 1
      %p169 = por %p167, %p168
      %p170 = scmp.ne.s32.totalorder %s159, %s160
      %p171 = scmp.eq.s32.totalorder %s19, 0
      %p172 = por %p170, %p171
      %p173 = scmp.ne.s32.totalorder %s159, %s160
      %p174 = scmp.eq.s32.totalorder %s20, 1
      %p175 = por %p173, %p174
      %p177 = scmp.ne.s32.totalorder %s160, %s176
      %p178 = scmp.eq.s32.totalorder %s20, 0
      %p179 = por %p177, %p178
      %p180 = scmp.le.s32.totalorder 1, %s14
      %p181 = scmp.lt.s32.totalorder %s14, 3
      %p182 = pnand %p180, %p181
      %p183 = pneg %p182
      // Predicated region
      $region9: #{transition_forward.1} parent=5 // pred_check
        _
      $region10: #{transition_forward.1} parent=5 // pred_check_branch
        %185 = sbr.rel (%p182) target = $region12
      $region11: #{transition_forward.1} parent=5 // pred_region
        %s186 = ssub.s32 %s14, 1
        // Predicated region
        $region13: #{transition_forward.1} parent=11 // pred_check
          %p187 = pneg %p73
        $region14: #{transition_forward.1} parent=11 // pred_check_branch
          %189 = sbr.rel (%p187) target = $region16
        $region15: #{transition_forward.1} parent=11 // pred_region
          _
        $region16: #{transition_forward.1} parent=11 // pred_fallthru
          _
        // Predicated region
        $region17: #{transition_forward.1} parent=11 // pred_check
          %p190 = pneg %p94
        $region18: #{transition_forward.1} parent=11 // pred_check_branch
          %192 = sbr.rel (%p190) target = $region20
        $region19: #{transition_forward.1} parent=11 // pred_region
          _
        $region20: #{transition_forward.1} parent=11 // pred_fallthru
          _
        // Predicated region
        $region21: #{transition_forward.1} parent=11 // pred_check
          %p193 = pneg %p120
        $region22: #{transition_forward.1} parent=11 // pred_check_branch
          %195 = sbr.rel (%p193) target = $region24
        $region23: #{transition_forward.1} parent=11 // pred_region
          %p196 = scmp.lt.s32.totalorder %s24, 0
          %s197 = scalar_select %p196, %s24, 0
          %s198 = smul.addr %s197, 8
          %s199 = smul.addr %s198, 4
          %s200 = scalar_lea.vmem %s3, %s199
        $region24: #{transition_forward.1} parent=11 // pred_fallthru
          _
        // Predicated region
        $region25: #{transition_forward.1} parent=11 // pred_check
          %p201 = pneg %p146
        $region26: #{transition_forward.1} parent=11 // pred_check_branch
          %203 = sbr.rel (%p201) target = $region28
        $region27: #{transition_forward.1} parent=11 // pred_region
          %p204 = scmp.lt.s32.totalorder %s24, 0
          %s205 = scalar_select %p204, %s24, 0
          %s206 = smul.addr %s205, 16
          %s207 = smul.addr %s206, 4
          %s208 = scalar_lea.vmem %s4, %s207
        $region28: #{transition_forward.1} parent=11 // pred_fallthru
          _
      $region12: #{transition_forward.1} parent=5 // pred_fallthru
        _
      %p209 = scmp.lt.s32.totalorder %s14, 2
      // Predicated region
      $region29: #{transition_forward.1} parent=5 // pred_check
        %p210 = pneg %p209
      $region30: #{transition_forward.1} parent=5 // pred_check_branch
        %212 = sbr.rel (%p210) target = $region32
      $region31: #{transition_forward.1} parent=5 // pred_region
        // Predicated region
        $region33: #{transition_forward.1} parent=31 // pred_check
          %p213 = pneg %p46
        $region34: #{transition_forward.1} parent=31 // pred_check_branch
          %215 = sbr.rel (%p213) target = $region36
        $region35: #{transition_forward.1} parent=31 // pred_region
          %p216 = scmp.lt.s32.totalorder %s21, 1
          %s217 = scalar_select %p216, %s21, 1
          %s218 = smul.addr %s217, 8
          %s219 = scalar_lea.vmem %s0, %s218
        $region36: #{transition_forward.1} parent=31 // pred_fallthru
          _
      $region32: #{transition_forward.1} parent=5 // pred_fallthru
        _
      %p220 = scmp.le.s32.totalorder 1, %s14
      %p221 = scmp.lt.s32.totalorder %s14, 3
      %p222 = pnand %p220, %p221
      %p223 = pneg %p222
      // Predicated region
      $region37: #{transition_forward.1} parent=5 // pred_check
        _
      $region38: #{transition_forward.1} parent=5 // pred_check_branch
        %225 = sbr.rel (%p222) target = $region40
      $region39: #{transition_forward.1} parent=5 // pred_region
        %s226 = ssub.s32 %s14, 1
        %p227 = scmp.lt.s32.totalorder %s23, 1
        %s228 = scalar_select %p227, %s23, 1
        %s229 = smul.addr %s228, 8
        %s230 = scalar_lea.vmem %s0, %s229
        %p231 = pneg %p52
        %p232 = pneg %p49
        %p233 = pneg %p73
        %p234 = pneg %p70
        %p235 = pneg %p94
        %p236 = pneg %p91
        %p237 = scmp.lt.s32.totalorder %s24, 0
        %s238 = scalar_select %p237, %s24, 0
        %s239 = smul.addr %s238, 8
        %s240 = smul.addr %s239, 4
        %s241 = scalar_lea.vmem %s3, %s240
        %p242 = pneg %p120
        %p243 = pneg %p117
        %p244 = scmp.lt.s32.totalorder %s24, 0
        %s245 = scalar_select %p244, %s24, 0
        %s246 = smul.addr %s245, 16
        %s247 = smul.addr %s246, 4
        %s248 = scalar_lea.vmem %s4, %s247
        %p249 = pneg %p146
        %p250 = pneg %p143
        %p251 = pneg %p172
        %p252 = pneg %p169
        %s253 = sand.u32 %s159, 1
        %s254 = scalar_lea.sflag [#allocation5], %s253
        %s255 = sand.u32 %s159, 1
        %s256 = smul.addr %s255, 8
        %s257 = scalar_lea.vmem [#allocation4], %s256
        %p258 = scmp.lt.s32.totalorder %s23, 1
        %s259 = scalar_select %p258, %s23, 1
        %s260 = smul.addr %s259, 8
        %s261 = scalar_lea.vmem %s0, %s260
        %p262 = scmp.lt.s32.totalorder %s24, 0
        %s263 = scalar_select %p262, %s24, 0
        %s264 = smul.addr %s263, 8
        %s265 = smul.addr %s264, 4
        %s266 = scalar_lea.vmem %s3, %s265
        %p267 = scmp.lt.s32.totalorder %s24, 0
        %s268 = scalar_select %p267, %s24, 0
        %s269 = smul.addr %s268, 16
        %s270 = smul.addr %s269, 4
        %s271 = scalar_lea.vmem %s4, %s270
        %p273 = scmp.eq.s32.totalorder %s24, 0
        // Predicated region
        $region41: #{transition_forward.1} parent=39 // pred_check
          %p274 = pneg %p273
        $region42: #{transition_forward.1} parent=39 // pred_check_branch
          %276 = sbr.rel (%p274) target = $region44
        $region43: #{transition_forward.1} parent=39 // pred_region
          %v277 = vld [vmem:[%s261] sm:$0xff]
          %vm278 = vcmask 261120
          %v279 = vsel %vm278, %v277, 0.0
          %280 = vadd.xlane.f32.xlu0 %v279
          %v281 = vpop.xlane.xlu0 %280
          %v282 = vrcp.pop 32.0
          %v283 = vmul.f32 %v281, %v282
          %v284 = vmul.f32 %v277, %v277
          %v285 = vsel %vm278, %v284, 0.0
          %286 = vadd.xlane.f32.xlu0 %v285
          %v287 = vpop.xlane.xlu0 %286
          %v288 = vmul.f32 %v287, %v282
          %v289 = vmul.f32 %v283, %v283
          %v290 = vsub.f32 %v288, %v289
          %v291 = vsub.f32 %v277, %v283
          %v292 = vadd.f32 %v290, 1e-05
          %v293 = vrsqrt.pop %v292
          %v294 = vmul.f32 %v291, %v293
          %v295 = vld [vmem:[%s1] sm:$0x1]
          %v297 = vlaneseq
          %v298 = vshrl.u32 %v297, 7
          %v299 = vsub.s32 0, %v298
          %v300 = vrot.slane %v295, %v299
          %v302 = vmul.f32 %v294, %v300
          %v303 = vld [vmem:[%s2] sm:$0x1]
          %v305 = vlaneseq
          %v306 = vshrl.u32 %v305, 7
          %v307 = vsub.s32 0, %v306
          %v308 = vrot.slane %v303, %v307
          %v310 = vadd.f32 %v302, %v308
          %v311 = vpack.c.bf16 %v310, %v310
          %vm312 = vcmask 257024
          %313 = vst.msk [vmem:[#allocation2] sm:$0xf] %vm312, %v311
          %314 = vst.msk [vmem:[#allocation3] sm:$0xff] %vm278, 0.0
        $region44: #{transition_forward.1} parent=39 // pred_fallthru
          _
        %v315 = vld [vmem:[#allocation2] sm:$0xf]
        %v316 = vld [vmem:[%s266] sm:$0xff]
        %v317 = vld [vmem:[%s266 + $0x8] sm:$0xff]
        %v318 = vld [vmem:[%s266 + $0x10] sm:$0xff]
        %v319 = vld [vmem:[%s266 + $0x18] sm:$0xff]
        %v324 = vunpack.c.l.b16 %v316
        %v325 = vunpack.c.h.b16 %v316
        %v326 = vunpack.c.l.b16 %v317
        %v327 = vunpack.c.h.b16 %v317
        %v328 = vunpack.c.l.b16 %v318
        %v329 = vunpack.c.h.b16 %v318
        %v330 = vunpack.c.l.b16 %v319
        %v331 = vunpack.c.h.b16 %v319
        %v332 = vpack.c.b16 %v326, %v324
        %v333 = vpack.c.b16 %v327, %v325
        %v334 = vpack.c.b16 %v330, %v328
        %v335 = vpack.c.b16 %v331, %v329
        %vm340 = vcmask 261120
        %v342 = vsel %vm340, %v315, 0
        %344 = vmatprep.subr.bf16.mxu0 0
        %345 = vmatpush1.bf16.msra.mxu0 0
        %346 = vmatprep.subr.bf16.mxu0 0
        %347 = vmatpush1.bf16.msra.mxu0 0
        %348 = vmatprep.subr.bf16.mxu0 0
        %349 = vmatpush1.bf16.msra.mxu0 0
        %350 = vmatprep.subr.bf16.mxu0 0
        %351 = vmatpush1.bf16.msra.mxu0 0
        %352 = vmatprep.subr.bf16.mxu0 0
        %353 = vmatpush1.bf16.msra.mxu0 0
        %354 = vmatprep.subr.bf16.mxu0 0
        %355 = vmatpush1.bf16.msra.mxu0 0
        %356 = vmatprep.subr.bf16.mxu0 %v335
        %357 = vmatpush1.bf16.msra.mxu0 %v334
        %358 = vmatprep.subr.bf16.mxu0 %v333
        %359 = vmatpush1.bf16.msra.mxu0 %v332
        %360 = vmatprep.subr.bf16.mxu0 0
        %361 = vmatpush2.bf16.msra.mxu0 0
        %362 = vmatprep.subr.bf16.mxu0 0
        %363 = vmatpush2.bf16.msra.mxu0 0
        %364 = vmatprep.subr.bf16.mxu0 0
        %365 = vmatpush2.bf16.msra.mxu0 0
        %366 = vmatprep.subr.bf16.mxu0 0
        %367 = vmatpush2.bf16.msra.mxu0 0
        %368 = vmatprep.subr.bf16.mxu0 0
        %369 = vmatpush2.bf16.msra.mxu0 0
        %370 = vmatprep.subr.bf16.mxu0 0
        %371 = vmatpush2.bf16.msra.mxu0 0
        %372 = vmatprep.subr.bf16.mxu0 0
        %373 = vmatpush2.bf16.msra.mxu0 0
        %374 = vmatprep.subr.bf16.mxu0 0
        %375 = vmatpush2.bf16.msra.mxu0 0
        %376 = vmatprep.mubr.bf16.mxu0 0
        %377 = vmatmul.mubr.bf16.gmra.mxu0 %v342
        %v378 = vpop.f32.mrf.mxu0
        %v379 = vadd.f32 0.0, %v378
        %v380 = vpop.f32.mrf.mxu0
        %v381 = vadd.f32 0.0, %v380
        %v382 = vpop.f32.mrf.mxu0
        %v383 = vpop.f32.mrf.mxu0
        %384 = vdwg.mxu0
        %v385 = vxor.u32 %v379, 2147483648
        %v386 = vmul.f32 %v385, 1.442695
        %v387 = vpow.pop %v386
        %v388 = vadd.f32 %v387, 1.0
        %v389 = vrcp.pop %v388
        %v390 = vmul.f32 1.0, %v389
        %v391 = vmul.f32 %v379, %v390
        %v392 = vmul.f32 %v391, %v381
        %v393 = vld [vmem:[#allocation3] sm:$0xff]
        %v394 = vpack.c.bf16 %v392, %v392
        %v395 = vld [vmem:[%s271] sm:$0xf]
        %v396 = vld [vmem:[%s271 + $0x4] sm:$0xf]
        %v397 = vld [vmem:[%s271 + $0x8] sm:$0xf]
        %v398 = vld [vmem:[%s271 + $0xc] sm:$0xf]
        %v399 = vld [vmem:[%s271 + $0x10] sm:$0xf]
        %v400 = vld [vmem:[%s271 + $0x14] sm:$0xf]
        %v401 = vld [vmem:[%s271 + $0x18] sm:$0xf]
        %v402 = vld [vmem:[%s271 + $0x1c] sm:$0xf]
        %v403 = vld [vmem:[%s271 + $0x20] sm:$0xf]
        %v404 = vld [vmem:[%s271 + $0x24] sm:$0xf]
        %v405 = vld [vmem:[%s271 + $0x28] sm:$0xf]
        %v406 = vld [vmem:[%s271 + $0x2c] sm:$0xf]
        %v407 = vld [vmem:[%s271 + $0x30] sm:$0xf]
        %v408 = vld [vmem:[%s271 + $0x34] sm:$0xf]
        %v409 = vld [vmem:[%s271 + $0x38] sm:$0xf]
        %v410 = vld [vmem:[%s271 + $0x3c] sm:$0xf]
        %v427 = vunpack.c.l.b16 %v395
        %v428 = vunpack.c.l.b16 %v396
        %v429 = vunpack.c.l.b16 %v397
        %v430 = vunpack.c.l.b16 %v398
        %v431 = vunpack.c.l.b16 %v399
        %v432 = vunpack.c.l.b16 %v400
        %v433 = vunpack.c.l.b16 %v401
        %v434 = vunpack.c.l.b16 %v402
        %v435 = vunpack.c.l.b16 %v403
        %v436 = vunpack.c.l.b16 %v404
        %v437 = vunpack.c.l.b16 %v405
        %v438 = vunpack.c.l.b16 %v406
        %v439 = vunpack.c.l.b16 %v407
        %v440 = vunpack.c.l.b16 %v408
        %v441 = vunpack.c.l.b16 %v409
        %v442 = vunpack.c.l.b16 %v410
        %v443 = vpack.c.b16 %v428, %v427
        %v444 = vpack.c.b16 %v430, %v429
        %v445 = vpack.c.b16 %v432, %v431
        %v446 = vpack.c.b16 %v434, %v433
        %v447 = vpack.c.b16 %v436, %v435
        %v448 = vpack.c.b16 %v438, %v437
        %v449 = vpack.c.b16 %v440, %v439
        %v450 = vpack.c.b16 %v442, %v441
        %459 = vmatprep.subr.bf16.mxu0 0
        %460 = vmatpush1.bf16.msra.mxu0 %v450
        %461 = vmatprep.subr.bf16.mxu0 0
        %462 = vmatpush1.bf16.msra.mxu0 %v449
        %463 = vmatprep.subr.bf16.mxu0 0
        %464 = vmatpush1.bf16.msra.mxu0 %v448
        %465 = vmatprep.subr.bf16.mxu0 0
        %466 = vmatpush1.bf16.msra.mxu0 %v447
        %467 = vmatprep.subr.bf16.mxu0 0
        %468 = vmatpush1.bf16.msra.mxu0 %v446
        %469 = vmatprep.subr.bf16.mxu0 0
        %470 = vmatpush1.bf16.msra.mxu0 %v445
        %471 = vmatprep.subr.bf16.mxu0 0
        %472 = vmatpush1.bf16.msra.mxu0 %v444
        %473 = vmatprep.subr.bf16.mxu0 0
        %474 = vmatpush1.bf16.msra.mxu0 %v443
        %475 = vmatprep.subr.bf16.mxu0 0
        %476 = vmatpush2.bf16.msra.mxu0 0
        %477 = vmatprep.subr.bf16.mxu0 0
        %478 = vmatpush2.bf16.msra.mxu0 0
        %479 = vmatprep.subr.bf16.mxu0 0
        %480 = vmatpush2.bf16.msra.mxu0 0
        %481 = vmatprep.subr.bf16.mxu0 0
        %482 = vmatpush2.bf16.msra.mxu0 0
        %483 = vmatprep.subr.bf16.mxu0 0
        %484 = vmatpush2.bf16.msra.mxu0 0
        %485 = vmatprep.subr.bf16.mxu0 0
        %486 = vmatpush2.bf16.msra.mxu0 0
        %487 = vmatprep.subr.bf16.mxu0 0
        %488 = vmatpush2.bf16.msra.mxu0 0
        %489 = vmatprep.subr.bf16.mxu0 0
        %490 = vmatpush2.bf16.msra.mxu0 0
        %491 = vmatprep.mubr.bf16.mxu0 0
        %492 = vmatmul.mubr.bf16.gmra.mxu0 %v394
        %v493 = vpop.f32.mrf.mxu0
        %v494 = vadd.f32 0.0, %v493
        %v495 = vpop.f32.mrf.mxu0
        %v496 = vpop.f32.mrf.mxu0
        %v497 = vpop.f32.mrf.mxu0
        %498 = vdwg.mxu0
        %v499 = vadd.f32 %v393, %v494
        %500 = vst.msk [vmem:[#allocation3] sm:$0xff] %vm340, %v499
        // Predicated region
        $region45: #{transition_forward.1} parent=39 // pred_check
          %p501 = pneg %p273
        $region46: #{transition_forward.1} parent=39 // pred_check_branch
          %503 = sbr.rel (%p501) target = $region48
        $region47: #{transition_forward.1} parent=39 // pred_region
          %v504 = vld [vmem:[#allocation3] sm:$0xff]
          %505 = vst.msk [vmem:[%s257] sm:$0xff] %vm340, %v504
        $region48: #{transition_forward.1} parent=39 // pred_fallthru
          _
        %s506 = sand.u32 %s159, 1
        %s507 = scalar_lea.sflag [#allocation5], %s506
        %s508 = sand.u32 %s159, 1
        %s509 = smul.addr %s508, 8
        %s510 = scalar_lea.vmem [#allocation4], %s509
        // Predicated region
        $region49: #{transition_forward.1} parent=39 // pred_check
          %p511 = pneg %p169
        $region50: #{transition_forward.1} parent=39 // pred_check_branch
          %513 = sbr.rel (%p511) target = $region52
        $region51: #{transition_forward.1} parent=39 // pred_region
          %s515 = ssub.s32 128, 128
          %516 = vsyncadd %s507, %s515
          %s517 = smul.addr %s23, 128
          %s518 = scalar_lea.hbm %s5, %s517
          %s520 = sshll.u32 %s510, 4
          %s521 = int_to_ptr.vmem [resolvable:$true] %s520
          %523 = dma.vmem_to_hbm [thread:$0]  %s521, 128, %s518, %s507
        $region52: #{transition_forward.1} parent=39 // pred_fallthru
          _
      $region40: #{transition_forward.1} parent=5 // pred_fallthru
        _
      %p524 = scmp.le.s32.totalorder 2, %s14
      // Predicated region
      $region53: #{transition_forward.1} parent=5 // pred_check
        %p525 = pneg %p524
      $region54: #{transition_forward.1} parent=5 // pred_check_branch
        %527 = sbr.rel (%p525) target = $region56
      $region55: #{transition_forward.1} parent=5 // pred_region
        %s528 = ssub.s32 %s14, 2
        // Predicated region
        $region57: #{transition_forward.1} parent=55 // pred_check
          %p529 = pneg %p175
        $region58: #{transition_forward.1} parent=55 // pred_check_branch
          %531 = sbr.rel (%p529) target = $region60
        $region59: #{transition_forward.1} parent=55 // pred_region
          %s532 = sand.u32 %s160, 1
          %s533 = scalar_lea.sflag [#allocation5], %s532
          %s534 = sand.u32 %s160, 1
          %s535 = smul.addr %s534, 8
          %s536 = scalar_lea.vmem [#allocation4], %s535
          %537 = dma.done %s533, 128
        $region60: #{transition_forward.1} parent=55 // pred_fallthru
          _
      $region56: #{transition_forward.1} parent=5 // pred_fallthru
        _
    $region6: #{transition_forward.1} parent=1 // loop_footer
      %s18 = sadd.s32 1, %s14
    $region7: #{transition_forward.1} parent=1 // loop_footer_branch
      %13 = sbr.rel target = $region3
    $region8: #{transition_forward.1} parent=1 // loop_exit
      _
    %538 = vsyncpa [#allocation5], 1
    %s539 = scalar_lea.sflag [#allocation5], 1
    %540 = vsyncpa %s539, 1

</llo_original>
